<compile_context>
chip_gen: v7x
topology: tpu7x:2x2x1
jax: 0.10.0
libtpu: 0.0.40
codegen_flags: <defaults>
</compile_context>

<pallas_src>
import functools
import math

import jax
import jax.numpy as jnp
from jax import lax
from jax.experimental import pallas as pl
from jax.experimental.pallas import tpu as pltpu


def _attention_kernel(x_ref, w_ref, merged_ref, *, B, S, D_attn):
    # x_ref:      (B*S, D_in+1)     -- trailing ones column folds the bias into the matmul
    # w_ref:      (D_in+1, 3*D_attn)-- pre-transposed; Q columns pre-scaled by 1/sqrt(D_attn)
    # merged_ref: (B*S, D_attn + S) -- [:, :D_attn] = output, [:, D_attn:] = attention weights
    qkv = jnp.dot(x_ref[...], w_ref[...],
                  preferred_element_type=jnp.float32)                   # (B*S, 3*D_attn)

    blocks = []
    for b in range(B):                  # B is small & static -> unrolled, pure 2D ops
        r0 = b * S                      # S == 8 -> sublane-aligned row slices
        q = qkv[r0:r0 + S, 0 * D_attn:1 * D_attn]   # already scaled by 1/sqrt(D_attn)
        k = qkv[r0:r0 + S, 1 * D_attn:2 * D_attn]
        v = qkv[r0:r0 + S, 2 * D_attn:3 * D_attn]

        # scores[i, j] = sum_d q[i, d] * k[j, d]  (no transposed tile materialized)
        scores = lax.dot_general(q, k,
                                 dimension_numbers=(((1,), (1,)), ((), ())),
                                 preferred_element_type=jnp.float32)    # (S, S)

        # Numerically stable softmax along the last axis.
        m = jnp.max(scores, axis=-1, keepdims=True)
        e = jnp.exp(scores - m)
        denom = jnp.sum(e, axis=-1, keepdims=True)
        r = pl.reciprocal(denom, approx=True)       # EUP slot, VALU-free
        r = r * (2.0 - denom * r)                   # one Newton step: ~1e-7 rel error
        attn = e * r                                                     # (S, S)

        out = jnp.dot(attn, v, preferred_element_type=jnp.float32)       # (S, D_attn)
        blocks.append(jnp.concatenate([out, attn], axis=1))              # (S, D_attn+S)

    # Single lane-contiguous store covering both outputs.
    merged_ref[...] = jnp.concatenate(blocks, axis=0).astype(merged_ref.dtype)


def fuse_qkv_params(wq, bq, wk, bk, wv, bv):
    """Fuse nn.Linear Q/K/V params into one (D_in+1, 3*D_attn) matrix.

    Call ONCE per model (hoisted out of the per-call path). The 1/sqrt(D_attn) score
    scale is folded into the Q columns (exact); the biases become the last contraction
    row (paired with a ones column appended to x in the wrapper).
    """
    D_attn = wq.shape[0]
    scale = 1.0 / math.sqrt(float(D_attn))
    w = jnp.concatenate([wq * scale, wk, wv], axis=0)      # (3*D_attn, D_in)
    b = jnp.concatenate([bq * scale, bk, bv], axis=0)      # (3*D_attn,)
    return jnp.concatenate([w.T, b[None, :]], axis=0)      # (D_in+1, 3*D_attn)


@jax.jit
def simple_attention(x, w_fused):
    """x: (B, S, D_in) float32; w_fused from fuse_qkv_params.

    Returns (output (B, S, D_attn), attention_weights (B, S, S)).
    """
    B, S, D_in = x.shape
    D_attn = w_fused.shape[1] // 3

    # Free contiguous reshape + ones column (fuses under jit) -> kernel stays 2D.
    x2d = x.reshape(B * S, D_in)
    x_aug = jnp.concatenate([x2d, jnp.ones((B * S, 1), x.dtype)], axis=1)

    kernel = functools.partial(_attention_kernel, B=B, S=S, D_attn=D_attn)

    merged = pl.pallas_call(
        kernel,
        out_shape=jax.ShapeDtypeStruct((B * S, D_attn + S), jnp.float32),
        grid_spec=pltpu.PrefetchScalarGridSpec(
            num_scalar_prefetch=0,
            grid=(1,),                                                    # single step
            in_specs=[
                pl.BlockSpec((B * S, D_in + 1), lambda i: (0, 0)),        # x (+ ones col)
                pl.BlockSpec((D_in + 1, 3 * D_attn), lambda i: (0, 0)),   # fused W (+ bias row)
            ],
            out_specs=pl.BlockSpec((B * S, D_attn + S), lambda i: (0, 0)),
        ),
        compiler_params=pltpu.CompilerParams(
            dimension_semantics=("arbitrary",)),
    )(x_aug, w_fused)

    out = merged[:, :D_attn].reshape(B, S, D_attn)
    attn = merged[:, D_attn:].reshape(B, S, S)
    return out, attn


def _reference(x, wq, bq, wk, bk, wv, bv):
    q = jnp.einsum("bsd,ad->bsa", x, wq) + bq
    k = jnp.einsum("bsd,ad->bsa", x, wk) + bk
    v = jnp.einsum("bsd,ad->bsa", x, wv) + bv
    scores = jnp.einsum("bqa,bka->bqk", q, k) / jnp.sqrt(
        jnp.asarray(q.shape[-1], jnp.float32))
    attn = jax.nn.softmax(scores, axis=-1)
    out = jnp.einsum("bqk,bka->bqa", attn, v)
    return out, attn


if __name__ == "__main__":
    input_dim = 16
    attention_dim = 32
    B, S = 2, 8

    key = jax.random.PRNGKey(0)
    kx, kwq, kbq, kwk, kbk, kwv, kbv = jax.random.split(key, 7)

    x = jax.random.normal(kx, (B, S, input_dim), dtype=jnp.float32)

    # nn.Linear-style deterministic init: U(-1/sqrt(fan_in), 1/sqrt(fan_in))
    bound = 1.0 / math.sqrt(input_dim)
    wq = jax.random.uniform(kwq, (attention_dim, input_dim), jnp.float32, -bound, bound)
    bq = jax.random.uniform(kbq, (attention_dim,), jnp.float32, -bound, bound)
    wk = jax.random.uniform(kwk, (attention_dim, input_dim), jnp.float32, -bound, bound)
    bk = jax.random.uniform(kbk, (attention_dim,), jnp.float32, -bound, bound)
    wv = jax.random.uniform(kwv, (attention_dim, input_dim), jnp.float32, -bound, bound)
    bv = jax.random.uniform(kbv, (attention_dim,), jnp.float32, -bound, bound)

    # Fuse weights once per model (hoisted out of the per-call path).
    w_fused = jax.block_until_ready(fuse_qkv_params(wq, bq, wk, bk, wv, bv))

    out, attn = simple_attention(x, w_fused)
    jax.block_until_ready((out, attn))

    ref_out, ref_attn = _reference(x, wq, bq, wk, bk, wv, bv)
    assert out.shape == (B, S, attention_dim)
    assert attn.shape == (B, S, S)
    assert jnp.allclose(out, ref_out, atol=1e-4, rtol=1e-4)
    assert jnp.allclose(attn, ref_attn, atol=1e-4, rtol=1e-4)

    print("KERNEL_OK")
</pallas_src>

<mosaic_0001>
module attributes {stable_mosaic.version = 11 : i64} {
  func.func @_attention_kernel(%arg0: i32, %arg1: memref<16x17xf32, #tpu.memory_space<vmem>>, %arg2: memref<17x96xf32, #tpu.memory_space<vmem>>, %arg3: memref<16x40xf32, #tpu.memory_space<vmem>>) attributes {dimension_semantics = [#tpu.dimension_semantics<arbitrary>], iteration_bounds = array<i64: 1>, scalar_prefetch = 0 : i64, scratch_operands = 0 : i64, tpu.core_type = #tpu.core_type<tc>, window_params = [{pipeline_mode = #tpu.pipeline_mode<synchronous>, transform_indices = @transform_0, window_bounds = array<i64: 16, 17>}, {pipeline_mode = #tpu.pipeline_mode<synchronous>, transform_indices = @transform_1, window_bounds = array<i64: 17, 96>}, {pipeline_mode = #tpu.pipeline_mode<synchronous>, transform_indices = @transform_2, window_bounds = array<i64: 16, 40>}]} {
    %c0 = arith.constant 0 : index
    %c0_0 = arith.constant 0 : index
    %0 = vector.load %arg1[%c0, %c0_0] : memref<16x17xf32, #tpu.memory_space<vmem>>, vector<16x17xf32>
    %c0_1 = arith.constant 0 : index
    %c0_2 = arith.constant 0 : index
    %1 = vector.load %arg2[%c0_1, %c0_2] : memref<17x96xf32, #tpu.memory_space<vmem>>, vector<17x96xf32>
    %cst = arith.constant dense<0.000000e+00> : vector<16x96xf32>
    %2 = tpu.matmul %0, %1, %cst {dimension_numbers = #tpu.dot_dimension_numbers<[1], [0], [0], [1], [0, 0, 1, 1], [], []>} : vector<16x17xf32>, vector<17x96xf32>, vector<16x96xf32> -> vector<16x96xf32>
    %3 = vector.extract_strided_slice %2 {offsets = [0, 0], sizes = [8, 32], strides = [1, 1]} : vector<16x96xf32> to vector<8x32xf32>
    %4 = vector.extract_strided_slice %2 {offsets = [0, 32], sizes = [8, 32], strides = [1, 1]} : vector<16x96xf32> to vector<8x32xf32>
    %5 = vector.extract_strided_slice %2 {offsets = [0, 64], sizes = [8, 32], strides = [1, 1]} : vector<16x96xf32> to vector<8x32xf32>
    %cst_3 = arith.constant dense<0.000000e+00> : vector<8x8xf32>
    %6 = tpu.matmul %3, %4, %cst_3 {dimension_numbers = #tpu.dot_dimension_numbers<[1], [1], [0], [0], [0, 0, 1, 0], [], []>} : vector<8x32xf32>, vector<8x32xf32>, vector<8x8xf32> -> vector<8x8xf32>
    %cst_4 = arith.constant dense<0xFF800000> : vector<8xf32>
    %7 = vector.multi_reduction <maximumf>, %6, %cst_4 [1] : vector<8x8xf32> to vector<8xf32>
    %8 = vector.shape_cast %7 : vector<8xf32> to vector<8x1xf32>
    %9 = vector.broadcast %8 : vector<8x1xf32> to vector<8x8xf32>
    %10 = arith.subf %6, %9 : vector<8x8xf32>
    %11 = math.exp %10 : vector<8x8xf32>
    %cst_5 = arith.constant dense<0.000000e+00> : vector<8xf32>
    %12 = vector.multi_reduction <add>, %11, %cst_5 [1] : vector<8x8xf32> to vector<8xf32>
    %13 = vector.shape_cast %12 : vector<8xf32> to vector<8x1xf32>
    %14 = tpu.reciprocal %13 {approx = true} : vector<8x1xf32> -> vector<8x1xf32>
    %15 = arith.mulf %13, %14 : vector<8x1xf32>
    %cst_6 = arith.constant 2.000000e+00 : f32
    %16 = vector.broadcast %cst_6 : f32 to vector<8x1xf32>
    %17 = arith.subf %16, %15 : vector<8x1xf32>
    %18 = arith.mulf %14, %17 : vector<8x1xf32>
    %19 = vector.broadcast %18 : vector<8x1xf32> to vector<8x8xf32>
    %20 = arith.mulf %11, %19 : vector<8x8xf32>
    %cst_7 = arith.constant dense<0.000000e+00> : vector<8x32xf32>
    %21 = tpu.matmul %20, %5, %cst_7 {dimension_numbers = #tpu.dot_dimension_numbers<[1], [0], [0], [1], [0, 0, 1, 1], [], []>} : vector<8x8xf32>, vector<8x32xf32>, vector<8x32xf32> -> vector<8x32xf32>
    %22 = tpu.concatenate %21, %20 in 1 : vector<8x32xf32>, vector<8x8xf32> -> vector<8x40xf32>
    %23 = vector.extract_strided_slice %2 {offsets = [8, 0], sizes = [8, 32], strides = [1, 1]} : vector<16x96xf32> to vector<8x32xf32>
    %24 = vector.extract_strided_slice %2 {offsets = [8, 32], sizes = [8, 32], strides = [1, 1]} : vector<16x96xf32> to vector<8x32xf32>
    %25 = vector.extract_strided_slice %2 {offsets = [8, 64], sizes = [8, 32], strides = [1, 1]} : vector<16x96xf32> to vector<8x32xf32>
    %cst_8 = arith.constant dense<0.000000e+00> : vector<8x8xf32>
    %26 = tpu.matmul %23, %24, %cst_8 {dimension_numbers = #tpu.dot_dimension_numbers<[1], [1], [0], [0], [0, 0, 1, 0], [], []>} : vector<8x32xf32>, vector<8x32xf32>, vector<8x8xf32> -> vector<8x8xf32>
    %cst_9 = arith.constant dense<0xFF800000> : vector<8xf32>
    %27 = vector.multi_reduction <maximumf>, %26, %cst_9 [1] : vector<8x8xf32> to vector<8xf32>
    %28 = vector.shape_cast %27 : vector<8xf32> to vector<8x1xf32>
    %29 = vector.broadcast %28 : vector<8x1xf32> to vector<8x8xf32>
    %30 = arith.subf %26, %29 : vector<8x8xf32>
    %31 = math.exp %30 : vector<8x8xf32>
    %cst_10 = arith.constant dense<0.000000e+00> : vector<8xf32>
    %32 = vector.multi_reduction <add>, %31, %cst_10 [1] : vector<8x8xf32> to vector<8xf32>
    %33 = vector.shape_cast %32 : vector<8xf32> to vector<8x1xf32>
    %34 = tpu.reciprocal %33 {approx = true} : vector<8x1xf32> -> vector<8x1xf32>
    %35 = arith.mulf %33, %34 : vector<8x1xf32>
    %cst_11 = arith.constant 2.000000e+00 : f32
    %36 = vector.broadcast %cst_11 : f32 to vector<8x1xf32>
    %37 = arith.subf %36, %35 : vector<8x1xf32>
    %38 = arith.mulf %34, %37 : vector<8x1xf32>
    %39 = vector.broadcast %38 : vector<8x1xf32> to vector<8x8xf32>
    %40 = arith.mulf %31, %39 : vector<8x8xf32>
    %cst_12 = arith.constant dense<0.000000e+00> : vector<8x32xf32>
    %41 = tpu.matmul %40, %25, %cst_12 {dimension_numbers = #tpu.dot_dimension_numbers<[1], [0], [0], [1], [0, 0, 1, 1], [], []>} : vector<8x8xf32>, vector<8x32xf32>, vector<8x32xf32> -> vector<8x32xf32>
    %42 = tpu.concatenate %41, %40 in 1 : vector<8x32xf32>, vector<8x8xf32> -> vector<8x40xf32>
    %43 = tpu.concatenate %22, %42 in 0 : vector<8x40xf32>, vector<8x40xf32> -> vector<16x40xf32>
    %c0_13 = arith.constant 0 : index
    %c0_14 = arith.constant 0 : index
    %44 = vector.load %arg3[%c0_13, %c0_14] : memref<16x40xf32, #tpu.memory_space<vmem>>, vector<16x40xf32>
    tpu.vector_store %arg3[%c0_13, %c0_14], %43 {strides = array<i32>} : memref<16x40xf32, #tpu.memory_space<vmem>>, vector<16x40xf32>,
    return
  }
  func.func @transform_0(%arg0: i32) -> (i32, i32) {
    %c0_i32 = arith.constant 0 : i32
    %c0_i32_0 = arith.constant 0 : i32
    %c0_i32_1 = arith.constant 0 : i32
    return %c0_i32, %c0_i32_0 : i32, i32
  }
  func.func @transform_1(%arg0: i32) -> (i32, i32) {
    %c0_i32 = arith.constant 0 : i32
    %c0_i32_0 = arith.constant 0 : i32
    %c0_i32_1 = arith.constant 0 : i32
    return %c0_i32, %c0_i32_0 : i32, i32
  }
  func.func @transform_2(%arg0: i32) -> (i32, i32) {
    %c0_i32 = arith.constant 0 : i32
    %c0_i32_0 = arith.constant 0 : i32
    %c0_i32_1 = arith.constant 0 : i32
    return %c0_i32, %c0_i32_0 : i32, i32
  }
}

</mosaic_0001>

<llo_original>
// kernel: simple_attention.1
$region0: #{simple_attention.1}
  #allocation0 [shape = 'u32[]', space=smem, size = 0x4, offset = 0x4, fixed_abs, tag = 'smem constant byte address 0x4 - core index']
  #allocation1 [shape = 'u32[144,128]{1,0:T(1,128)}', space=vmem, size = 0x12000, scoped, tag = 'internal scratch']
  %s0 = inlined_call_operand.vmem [shape: f32[16,17], index: 0, kind: input, shape index: {}]
  %s1 = inlined_call_operand.vmem [shape: f32[17,96], index: 1, kind: input, shape index: {}]
  %s2 = inlined_call_operand.vmem [shape: f32[16,40], index: 2, kind: output, shape index: {}]
  %s3 = sld [smem:[#allocation0]]
  $region18: #{simple_attention.1} parent=0
    _
  %s5 = ssub.s32 1, %s3
  %s6 = scalar_select 0, %s5, %s3
  // Predicated region
  $region2: #{simple_attention.1} parent=0 // pred_check
    _
  $region3: #{simple_attention.1} parent=0 // pred_check_branch
    %8 = sbr.rel (0) target = $region5
  $region4: #{simple_attention.1} parent=0 // pred_region
    _
  $region5: #{simple_attention.1} parent=0 // pred_fallthru
    _
  // Predicated region
  $region6: #{simple_attention.1} parent=0 // pred_check
    _
  $region7: #{simple_attention.1} parent=0 // pred_check_branch
    %10 = sbr.rel (0) target = $region9
  $region8: #{simple_attention.1} parent=0 // pred_region
    _
  $region9: #{simple_attention.1} parent=0 // pred_fallthru
    _
  %v11 = vld [vmem:[%s0] sm:$0xff]
  %v12 = vld [vmem:[%s0 + $0x8] sm:$0xff]
  %v13 = vld [vmem:[%s1] sm:$0xff]
  %v14 = vld [vmem:[%s1 + $0x8] sm:$0xff]
  %v15 = vld [vmem:[%s1 + $0x10] sm:$0x1]
  %vm16 = vcmask 138240
  %v18 = vsel %vm16, %v11, 0
  %v21 = vsel %vm16, %v12, 0
  %vm23 = vcmask 1040384
  %v25 = vsel %vm23, %v15, 0
  %27 = vmatprep.subr.mxu0 0.0
  %28 = vmatpush1.msra.mxu0 %v13
  %29 = vmatprep.subr.mxu0 0.0
  %30 = vmatpush1.msra.mxu0 %v14
  %31 = vmatprep.subr.mxu0 0.0
  %32 = vmatpush1.msra.mxu0 %v25
  %33 = vmatprep.subr.mxu0 0.0
  %34 = vmatpush1.msra.mxu0 0.0
  %35 = vmatprep.subr.mxu0 0.0
  %36 = vmatpush1.msra.mxu0 0.0
  %37 = vmatprep.subr.mxu0 0.0
  %38 = vmatpush1.msra.mxu0 0.0
  %39 = vmatprep.subr.mxu0 0.0
  %40 = vmatpush1.msra.mxu0 0.0
  %41 = vmatprep.subr.mxu0 0.0
  %42 = vmatpush1.msra.mxu0 0.0
  %43 = vmatprep.subr.mxu0 0.0
  %44 = vmatpush1.msra.mxu0 0.0
  %45 = vmatprep.subr.mxu0 0.0
  %46 = vmatpush1.msra.mxu0 0.0
  %47 = vmatprep.subr.mxu0 0.0
  %48 = vmatpush1.msra.mxu0 0.0
  %49 = vmatprep.subr.mxu0 0.0
  %50 = vmatpush1.msra.mxu0 0.0
  %51 = vmatprep.subr.mxu0 0.0
  %52 = vmatpush1.msra.mxu0 0.0
  %53 = vmatprep.subr.mxu0 0.0
  %54 = vmatpush1.msra.mxu0 0.0
  %55 = vmatprep.subr.mxu0 0.0
  %56 = vmatpush1.msra.mxu0 0.0
  %57 = vmatprep.subr.mxu0 0.0
  %58 = vmatpush1.msra.mxu0 0.0
  %59 = vmatprep.subr.mxu0 0.0
  %60 = vmatpush1.msra.mxu0 0.0
  %61 = vmatprep.subr.mxu0 0.0
  %62 = vmatpush1.msra.mxu0 0.0
  %63 = vmatprep.subr.mxu0 0.0
  %64 = vmatpush1.msra.mxu0 0.0
  %65 = vmatprep.subr.mxu0 0.0
  %66 = vmatpush1.msra.mxu0 0.0
  %67 = vmatprep.subr.mxu0 0.0
  %68 = vmatpush1.msra.mxu0 0.0
  %69 = vmatprep.subr.mxu0 0.0
  %70 = vmatpush1.msra.mxu0 0.0
  %71 = vmatprep.subr.mxu0 0.0
  %72 = vmatpush1.msra.mxu0 0.0
  %73 = vmatprep.subr.mxu0 0.0
  %74 = vmatpush1.msra.mxu0 0.0
  %75 = vmatprep.subr.mxu0 0.0
  %76 = vmatpush1.msra.mxu0 0.0
  %77 = vmatprep.subr.mxu0 0.0
  %78 = vmatpush1.msra.mxu0 0.0
  %79 = vmatprep.subr.mxu0 0.0
  %80 = vmatpush1.msra.mxu0 0.0
  %81 = vmatprep.subr.mxu0 0.0
  %82 = vmatpush1.msra.mxu0 0.0
  %83 = vmatprep.subr.mxu0 0.0
  %84 = vmatpush1.msra.mxu0 0.0
  %85 = vmatprep.subr.mxu0 0.0
  %86 = vmatpush1.msra.mxu0 0.0
  %87 = vmatprep.subr.mxu0 0.0
  %88 = vmatpush1.msra.mxu0 0.0
  %89 = vmatprep.subr.mxu0 0.0
  %90 = vmatpush1.msra.mxu0 0.0
  %91 = vmatprep.mubr.f32.mxu0 0.0
  %92 = vmatmul.mubr.f32.gmra.mrb[0].mxu0 %v18
  %v93 = vpop.f32.mrb[0].mxu0
  %v94 = vadd.f32 0.0, %v93
  %v95 = vpop.f32.mrb[0].mxu0
  %96 = vmatprep.mubr.f32.mxu0 0.0
  %97 = vmatmul.mubr.f32.gmra.mrb[0].mxu0 %v21
  %v98 = vpop.f32.mrb[0].mxu0
  %v99 = vadd.f32 0.0, %v98
  %v100 = vpop.f32.mrb[0].mxu0
  %101 = vdwg.mxu0
  %103 = vrot.lane.b32.xlu0 %v94, 96
  %v104 = vpop.permute.xlu0 %103
  %vm105 = vcmask 261120
  %v106 = vsel %vm105, %v94, 0
  %v108 = vsel %vm105, %v104, 0
  %110 = vmatprep.subr.mxu0 0.0
  %111 = vmatpush1.xpose.msra.mxu0 %v108
  %112 = vmatprep.subr.mxu0 0.0
  %113 = vmatpush1.xpose.msra.mxu0 0.0
  %114 = vmatprep.subr.mxu0 0.0
  %115 = vmatpush1.xpose.msra.mxu0 0.0
  %116 = vmatprep.subr.mxu0 0.0
  %117 = vmatpush1.xpose.msra.mxu0 0.0
  %118 = vmatprep.subr.mxu0 0.0
  %119 = vmatpush1.xpose.msra.mxu0 0.0
  %120 = vmatprep.subr.mxu0 0.0
  %121 = vmatpush1.xpose.msra.mxu0 0.0
  %122 = vmatprep.subr.mxu0 0.0
  %123 = vmatpush1.xpose.msra.mxu0 0.0
  %124 = vmatprep.subr.mxu0 0.0
  %125 = vmatpush1.xpose.msra.mxu0 0.0
  %126 = vmatprep.subr.mxu0 0.0
  %127 = vmatpush1.xpose.msra.mxu0 0.0
  %128 = vmatprep.subr.mxu0 0.0
  %129 = vmatpush1.xpose.msra.mxu0 0.0
  %130 = vmatprep.subr.mxu0 0.0
  %131 = vmatpush1.xpose.msra.mxu0 0.0
  %132 = vmatprep.subr.mxu0 0.0
  %133 = vmatpush1.xpose.msra.mxu0 0.0
  %134 = vmatprep.subr.mxu0 0.0
  %135 = vmatpush1.xpose.msra.mxu0 0.0
  %136 = vmatprep.subr.mxu0 0.0
  %137 = vmatpush1.xpose.msra.mxu0 0.0
  %138 = vmatprep.subr.mxu0 0.0
  %139 = vmatpush1.xpose.msra.mxu0 0.0
  %140 = vmatprep.subr.mxu0 0.0
  %141 = vmatpush1.xpose.msra.mxu0 0.0
  %142 = vmatprep.subr.mxu0 0.0
  %143 = vmatpush1.xpose.msra.mxu0 0.0
  %144 = vmatprep.subr.mxu0 0.0
  %145 = vmatpush1.xpose.msra.mxu0 0.0
  %146 = vmatprep.subr.mxu0 0.0
  %147 = vmatpush1.xpose.msra.mxu0 0.0
  %148 = vmatprep.subr.mxu0 0.0
  %149 = vmatpush1.xpose.msra.mxu0 0.0
  %150 = vmatprep.subr.mxu0 0.0
  %151 = vmatpush1.xpose.msra.mxu0 0.0
  %152 = vmatprep.subr.mxu0 0.0
  %153 = vmatpush1.xpose.msra.mxu0 0.0
  %154 = vmatprep.subr.mxu0 0.0
  %155 = vmatpush1.xpose.msra.mxu0 0.0
  %156 = vmatprep.subr.mxu0 0.0
  %157 = vmatpush1.xpose.msra.mxu0 0.0
  %158 = vmatprep.subr.mxu0 0.0
  %159 = vmatpush1.xpose.msra.mxu0 0.0
  %160 = vmatprep.subr.mxu0 0.0
  %161 = vmatpush1.xpose.msra.mxu0 0.0
  %162 = vmatprep.subr.mxu0 0.0
  %163 = vmatpush1.xpose.msra.mxu0 0.0
  %164 = vmatprep.subr.mxu0 0.0
  %165 = vmatpush1.xpose.msra.mxu0 0.0
  %166 = vmatprep.subr.mxu0 0.0
  %167 = vmatpush1.xpose.msra.mxu0 0.0
  %168 = vmatprep.subr.mxu0 0.0
  %169 = vmatpush1.xpose.msra.mxu0 0.0
  %170 = vmatprep.subr.mxu0 0.0
  %171 = vmatpush1.xpose.msra.mxu0 0.0
  %172 = vmatprep.subr.mxu0 0.0
  %173 = vmatpush1.xpose.msra.mxu0 0.0
  %174 = vmatprep.mubr.f32.mxu0 0.0
  %175 = vmatmul.mubr.f32.gmra.mrb[0].mxu0 %v106
  %v176 = vpop.f32.mrb[0].mxu0
  %v177 = vadd.f32 0.0, %v176
  %v178 = vpop.f32.mrb[0].mxu0
  %179 = vdwg.mxu0
  %vm180 = vcmask 64512
  %v181 = vsel %vm180, %v177, -inf
  %182 = vmax.xlane.f32.xlu0 %v181
  %v183 = vpop.xlane.xlu0 %182
  %v184 = vsub.f32 %v177, %v183
  %v185 = vmul.f32 %v184, 1.442695
  %v186 = vpow.pop %v185
  %v187 = vsel %vm180, %v186, 0.0
  %188 = vadd.xlane.f32.xlu0 %v187
  %v189 = vpop.xlane.xlu0 %188
  %v190 = vrcp.pop %v189
  %v191 = vmul.f32 %v189, %v190
  %v192 = vsub.f32 2.0, %v191
  %v193 = vmul.f32 %v190, %v192
  %v194 = vmul.f32 %v186, %v193
  %195 = vrot.lane.b32.xlu0 %v94, 64
  %v196 = vpop.permute.xlu0 %195
  %v199 = vsel %vm180, %v194, 0
  %201 = vmatprep.subr.mxu0 0.0
  %202 = vmatpush1.msra.mxu0 %v196
  %203 = vmatprep.subr.mxu0 0.0
  %204 = vmatpush1.msra.mxu0 0.0
  %205 = vmatprep.subr.mxu0 0.0
  %206 = vmatpush1.msra.mxu0 0.0
  %207 = vmatprep.subr.mxu0 0.0
  %208 = vmatpush1.msra.mxu0 0.0
  %209 = vmatprep.subr.mxu0 0.0
  %210 = vmatpush1.msra.mxu0 0.0
  %211 = vmatprep.subr.mxu0 0.0
  %212 = vmatpush1.msra.mxu0 0.0
  %213 = vmatprep.subr.mxu0 0.0
  %214 = vmatpush1.msra.mxu0 0.0
  %215 = vmatprep.subr.mxu0 0.0
  %216 = vmatpush1.msra.mxu0 0.0
  %217 = vmatprep.subr.mxu0 0.0
  %218 = vmatpush1.msra.mxu0 0.0
  %219 = vmatprep.subr.mxu0 0.0
  %220 = vmatpush1.msra.mxu0 0.0
  %221 = vmatprep.subr.mxu0 0.0
  %222 = vmatpush1.msra.mxu0 0.0
  %223 = vmatprep.subr.mxu0 0.0
  %224 = vmatpush1.msra.mxu0 0.0
  %225 = vmatprep.subr.mxu0 0.0
  %226 = vmatpush1.msra.mxu0 0.0
  %227 = vmatprep.subr.mxu0 0.0
  %228 = vmatpush1.msra.mxu0 0.0
  %229 = vmatprep.subr.mxu0 0.0
  %230 = vmatpush1.msra.mxu0 0.0
  %231 = vmatprep.subr.mxu0 0.0
  %232 = vmatpush1.msra.mxu0 0.0
  %233 = vmatprep.subr.mxu0 0.0
  %234 = vmatpush1.msra.mxu0 0.0
  %235 = vmatprep.subr.mxu0 0.0
  %236 = vmatpush1.msra.mxu0 0.0
  %237 = vmatprep.subr.mxu0 0.0
  %238 = vmatpush1.msra.mxu0 0.0
  %239 = vmatprep.subr.mxu0 0.0
  %240 = vmatpush1.msra.mxu0 0.0
  %241 = vmatprep.subr.mxu0 0.0
  %242 = vmatpush1.msra.mxu0 0.0
  %243 = vmatprep.subr.mxu0 0.0
  %244 = vmatpush1.msra.mxu0 0.0
  %245 = vmatprep.subr.mxu0 0.0
  %246 = vmatpush1.msra.mxu0 0.0
  %247 = vmatprep.subr.mxu0 0.0
  %248 = vmatpush1.msra.mxu0 0.0
  %249 = vmatprep.subr.mxu0 0.0
  %250 = vmatpush1.msra.mxu0 0.0
  %251 = vmatprep.subr.mxu0 0.0
  %252 = vmatpush1.msra.mxu0 0.0
  %253 = vmatprep.subr.mxu0 0.0
  %254 = vmatpush1.msra.mxu0 0.0
  %255 = vmatprep.subr.mxu0 0.0
  %256 = vmatpush1.msra.mxu0 0.0
  %257 = vmatprep.subr.mxu0 0.0
  %258 = vmatpush1.msra.mxu0 0.0
  %259 = vmatprep.subr.mxu0 0.0
  %260 = vmatpush1.msra.mxu0 0.0
  %261 = vmatprep.subr.mxu0 0.0
  %262 = vmatpush1.msra.mxu0 0.0
  %263 = vmatprep.subr.mxu0 0.0
  %264 = vmatpush1.msra.mxu0 0.0
  %265 = vmatprep.mubr.f32.mxu0 0.0
  %266 = vmatmul.mubr.f32.gmra.mrb[0].mxu0 %v199
  %v267 = vpop.f32.mrb[0].mxu0
  %v268 = vadd.f32 0.0, %v267
  %v269 = vpop.f32.mrb[0].mxu0
  %270 = vdwg.mxu0
  %271 = vrot.lane.b32.xlu0 %v194, 32
  %v272 = vpop.permute.xlu0 %271
  %v274 = vsel %vm105, %v268, %v272
  %276 = vrot.lane.b32.xlu0 %v99, 96
  %v277 = vpop.permute.xlu0 %276
  %v278 = vsel %vm105, %v99, 0
  %v280 = vsel %vm105, %v277, 0
  %282 = vmatprep.subr.mxu0 0.0
  %283 = vmatpush1.xpose.msra.mxu0 %v280
  %284 = vmatprep.subr.mxu0 0.0
  %285 = vmatpush1.xpose.msra.mxu0 0.0
  %286 = vmatprep.subr.mxu0 0.0
  %287 = vmatpush1.xpose.msra.mxu0 0.0
  %288 = vmatprep.subr.mxu0 0.0
  %289 = vmatpush1.xpose.msra.mxu0 0.0
  %290 = vmatprep.subr.mxu0 0.0
  %291 = vmatpush1.xpose.msra.mxu0 0.0
  %292 = vmatprep.subr.mxu0 0.0
  %293 = vmatpush1.xpose.msra.mxu0 0.0
  %294 = vmatprep.subr.mxu0 0.0
  %295 = vmatpush1.xpose.msra.mxu0 0.0
  %296 = vmatprep.subr.mxu0 0.0
  %297 = vmatpush1.xpose.msra.mxu0 0.0
  %298 = vmatprep.subr.mxu0 0.0
  %299 = vmatpush1.xpose.msra.mxu0 0.0
  %300 = vmatprep.subr.mxu0 0.0
  %301 = vmatpush1.xpose.msra.mxu0 0.0
  %302 = vmatprep.subr.mxu0 0.0
  %303 = vmatpush1.xpose.msra.mxu0 0.0
  %304 = vmatprep.subr.mxu0 0.0
  %305 = vmatpush1.xpose.msra.mxu0 0.0
  %306 = vmatprep.subr.mxu0 0.0
  %307 = vmatpush1.xpose.msra.mxu0 0.0
  %308 = vmatprep.subr.mxu0 0.0
  %309 = vmatpush1.xpose.msra.mxu0 0.0
  %310 = vmatprep.subr.mxu0 0.0
  %311 = vmatpush1.xpose.msra.mxu0 0.0
  %312 = vmatprep.subr.mxu0 0.0
  %313 = vmatpush1.xpose.msra.mxu0 0.0
  %314 = vmatprep.subr.mxu0 0.0
  %315 = vmatpush1.xpose.msra.mxu0 0.0
  %316 = vmatprep.subr.mxu0 0.0
  %317 = vmatpush1.xpose.msra.mxu0 0.0
  %318 = vmatprep.subr.mxu0 0.0
  %319 = vmatpush1.xpose.msra.mxu0 0.0
  %320 = vmatprep.subr.mxu0 0.0
  %321 = vmatpush1.xpose.msra.mxu0 0.0
  %322 = vmatprep.subr.mxu0 0.0
  %323 = vmatpush1.xpose.msra.mxu0 0.0
  %324 = vmatprep.subr.mxu0 0.0
  %325 = vmatpush1.xpose.msra.mxu0 0.0
  %326 = vmatprep.subr.mxu0 0.0
  %327 = vmatpush1.xpose.msra.mxu0 0.0
  %328 = vmatprep.subr.mxu0 0.0
  %329 = vmatpush1.xpose.msra.mxu0 0.0
  %330 = vmatprep.subr.mxu0 0.0
  %331 = vmatpush1.xpose.msra.mxu0 0.0
  %332 = vmatprep.subr.mxu0 0.0
  %333 = vmatpush1.xpose.msra.mxu0 0.0
  %334 = vmatprep.subr.mxu0 0.0
  %335 = vmatpush1.xpose.msra.mxu0 0.0
  %336 = vmatprep.subr.mxu0 0.0
  %337 = vmatpush1.xpose.msra.mxu0 0.0
  %338 = vmatprep.subr.mxu0 0.0
  %339 = vmatpush1.xpose.msra.mxu0 0.0
  %340 = vmatprep.subr.mxu0 0.0
  %341 = vmatpush1.xpose.msra.mxu0 0.0
  %342 = vmatprep.subr.mxu0 0.0
  %343 = vmatpush1.xpose.msra.mxu0 0.0
  %344 = vmatprep.subr.mxu0 0.0
  %345 = vmatpush1.xpose.msra.mxu0 0.0
  %346 = vmatprep.mubr.f32.mxu0 0.0
  %347 = vmatmul.mubr.f32.gmra.mrb[0].mxu0 %v278
  %v348 = vpop.f32.mrb[0].mxu0
  %v349 = vadd.f32 0.0, %v348
  %v350 = vpop.f32.mrb[0].mxu0
  %351 = vdwg.mxu0
  %v352 = vsel %vm180, %v349, -inf
  %353 = vmax.xlane.f32.xlu0 %v352
  %v354 = vpop.xlane.xlu0 %353
  %v355 = vsub.f32 %v349, %v354
  %v356 = vmul.f32 %v355, 1.442695
  %v357 = vpow.pop %v356
  %v358 = vsel %vm180, %v357, 0.0
  %359 = vadd.xlane.f32.xlu0 %v358
  %v360 = vpop.xlane.xlu0 %359
  %v361 = vrcp.pop %v360
  %v362 = vmul.f32 %v360, %v361
  %v363 = vsub.f32 2.0, %v362
  %v364 = vmul.f32 %v361, %v363
  %v365 = vmul.f32 %v357, %v364
  %366 = vrot.lane.b32.xlu0 %v99, 64
  %v367 = vpop.permute.xlu0 %366
  %v370 = vsel %vm180, %v365, 0
  %372 = vmatprep.subr.mxu0 0.0
  %373 = vmatpush1.msra.mxu0 %v367
  %374 = vmatprep.subr.mxu0 0.0
  %375 = vmatpush1.msra.mxu0 0.0
  %376 = vmatprep.subr.mxu0 0.0
  %377 = vmatpush1.msra.mxu0 0.0
  %378 = vmatprep.subr.mxu0 0.0
  %379 = vmatpush1.msra.mxu0 0.0
  %380 = vmatprep.subr.mxu0 0.0
  %381 = vmatpush1.msra.mxu0 0.0
  %382 = vmatprep.subr.mxu0 0.0
  %383 = vmatpush1.msra.mxu0 0.0
  %384 = vmatprep.subr.mxu0 0.0
  %385 = vmatpush1.msra.mxu0 0.0
  %386 = vmatprep.subr.mxu0 0.0
  %387 = vmatpush1.msra.mxu0 0.0
  %388 = vmatprep.subr.mxu0 0.0
  %389 = vmatpush1.msra.mxu0 0.0
  %390 = vmatprep.subr.mxu0 0.0
  %391 = vmatpush1.msra.mxu0 0.0
  %392 = vmatprep.subr.mxu0 0.0
  %393 = vmatpush1.msra.mxu0 0.0
  %394 = vmatprep.subr.mxu0 0.0
  %395 = vmatpush1.msra.mxu0 0.0
  %396 = vmatprep.subr.mxu0 0.0
  %397 = vmatpush1.msra.mxu0 0.0
  %398 = vmatprep.subr.mxu0 0.0
  %399 = vmatpush1.msra.mxu0 0.0
  %400 = vmatprep.subr.mxu0 0.0
  %401 = vmatpush1.msra.mxu0 0.0
  %402 = vmatprep.subr.mxu0 0.0
  %403 = vmatpush1.msra.mxu0 0.0
  %404 = vmatprep.subr.mxu0 0.0
  %405 = vmatpush1.msra.mxu0 0.0
  %406 = vmatprep.subr.mxu0 0.0
  %407 = vmatpush1.msra.mxu0 0.0
  %408 = vmatprep.subr.mxu0 0.0
  %409 = vmatpush1.msra.mxu0 0.0
  %410 = vmatprep.subr.mxu0 0.0
  %411 = vmatpush1.msra.mxu0 0.0
  %412 = vmatprep.subr.mxu0 0.0
  %413 = vmatpush1.msra.mxu0 0.0
  %414 = vmatprep.subr.mxu0 0.0
  %415 = vmatpush1.msra.mxu0 0.0
  %416 = vmatprep.subr.mxu0 0.0
  %417 = vmatpush1.msra.mxu0 0.0
  %418 = vmatprep.subr.mxu0 0.0
  %419 = vmatpush1.msra.mxu0 0.0
  %420 = vmatprep.subr.mxu0 0.0
  %421 = vmatpush1.msra.mxu0 0.0
  %422 = vmatprep.subr.mxu0 0.0
  %423 = vmatpush1.msra.mxu0 0.0
  %424 = vmatprep.subr.mxu0 0.0
  %425 = vmatpush1.msra.mxu0 0.0
  %426 = vmatprep.subr.mxu0 0.0
  %427 = vmatpush1.msra.mxu0 0.0
  %428 = vmatprep.subr.mxu0 0.0
  %429 = vmatpush1.msra.mxu0 0.0
  %430 = vmatprep.subr.mxu0 0.0
  %431 = vmatpush1.msra.mxu0 0.0
  %432 = vmatprep.subr.mxu0 0.0
  %433 = vmatpush1.msra.mxu0 0.0
  %434 = vmatprep.subr.mxu0 0.0
  %435 = vmatpush1.msra.mxu0 0.0
  %436 = vmatprep.mubr.f32.mxu0 0.0
  %437 = vmatmul.mubr.f32.gmra.mrb[0].mxu0 %v370
  %v438 = vpop.f32.mrb[0].mxu0
  %v439 = vadd.f32 0.0, %v438
  %v440 = vpop.f32.mrb[0].mxu0
  %441 = vdwg.mxu0
  %442 = vrot.lane.b32.xlu0 %v365, 32
  %v443 = vpop.permute.xlu0 %442
  %v445 = vsel %vm105, %v439, %v443
  %vm446 = vcmask 326656
  %447 = vst.msk [vmem:[%s2] sm:$0xff] %vm446, %v274
  %448 = vst.msk [vmem:[%s2 + $0x8] sm:$0xff] %vm446, %v445
  // Predicated region
  $region10: #{simple_attention.1} parent=0 // pred_check
    _
  $region11: #{simple_attention.1} parent=0 // pred_check_branch
    %450 = sbr.rel (0) target = $region13
  $region12: #{simple_attention.1} parent=0 // pred_region
    _
  $region13: #{simple_attention.1} parent=0 // pred_fallthru
    _
  // Predicated region
  $region14: #{simple_attention.1} parent=0 // pred_check
    _
  $region15: #{simple_attention.1} parent=0 // pred_check_branch
    %452 = sbr.rel (0) target = $region17
  $region16: #{simple_attention.1} parent=0 // pred_region
    _
  $region17: #{simple_attention.1} parent=0 // pred_fallthru
    _

</llo_original>
